<compile_context>
chip_gen: v7x
topology: tpu7x:2x2x1
jax: 0.10.0
libtpu: 0.0.40
codegen_flags: <defaults>
</compile_context>

<pallas_src>
import jax
import jax.numpy as jnp
from jax.experimental import pallas as pl
from jax.experimental.pallas import tpu as pltpu


def _affine_kernel(x_ref, p_ref, o_ref):
    # x_ref: (tb, F); p_ref: (2, F)  [row 0 = scale, row 1 = bias]
    p = p_ref[...]
    scale = p[0:1, :]                 # (1, F) -> broadcast over rows in-vreg
    bias = p[1:2, :]                  # (1, F)
    o_ref[...] = (x_ref[...] * scale + bias).astype(o_ref.dtype)


def _round_up(n, m):
    return ((n + m - 1) // m) * m


def _choose_row_tile(B, row_tile_cap):
    """Row tile: multiple of 8 sublanes, aiming for >= 8 grid steps on large B
    so pipelining / core-parallel sharding has work; tb == B for tiny batches
    (legal because the block dim then equals the full array dim)."""
    if B <= 8:
        return B
    tb = _round_up(pl.cdiv(B, 8), 8)      # target ~8 grid steps
    tb = max(8, min(tb, row_tile_cap))
    return tb


def model_forward(x, w0, w1, w2, *, row_tile=1024):
    """x: (B, 12, 52) f32; w0/w1/w2: (1, 12, 52) f32 (broadcast over batch)."""
    B, C, L = x.shape
    F = C * L                                   # 624

    # Fold all params into one resident (2, F) block: row 0 = scale (w2),
    # row 1 = bias (w0*w1*w2). Tiny (2 x 624) compute, done once per call.
    scale = w2.reshape(1, F)
    bias = (w0 * w1 * w2).reshape(1, F)
    params = jnp.concatenate([scale, bias], axis=0)      # (2, F)

    # Free reshape (contiguous); no padding, no post-slice.
    x2 = x.reshape(B, F)

    tb = _choose_row_tile(B, row_tile)
    grid = (pl.cdiv(B, tb),)

    cost = pl.CostEstimate(
        flops=2 * B * F,                    # one mul + one add per element
        transcendentals=0,
        bytes_accessed=2 * B * F * 4 + 2 * F * 4,
    )

    out = pl.pallas_call(
        _affine_kernel,
        out_shape=jax.ShapeDtypeStruct((B, F), x.dtype),
        grid=grid,
        in_specs=[
            pl.BlockSpec((tb, F), lambda i: (i, 0)),
            pl.BlockSpec((2, F), lambda i: (0, 0)),
        ],
        out_specs=pl.BlockSpec((tb, F), lambda i: (i, 0)),
        compiler_params=pltpu.CompilerParams(
            dimension_semantics=("parallel",)),
        cost_estimate=cost,
    )(x2, params)

    return out.reshape(B, C, L)


def _reference(x, w0, w1, w2):
    # Faithful plain-JAX forward (including the no-op chain).
    r = x + 0.0
    r = r * 1.0 / 1.0
    r = 0.0 + 1.0 * r
    r = r + w0 * w1
    r = r * w2
    return r


if __name__ == "__main__":
    key = jax.random.PRNGKey(0)
    B, C, L = 2, 12, 52

    kx, k0, k1, k2 = jax.random.split(key, 4)
    x = jax.random.normal(kx, (B, C, L), dtype=jnp.float32)

    # Deterministic parameter init matching nn.Module.__init__
    w0 = jnp.zeros((1, C, L), dtype=jnp.float32)
    w1 = jnp.ones((1, C, L), dtype=jnp.float32)
    w2 = jnp.ones((1, C, L), dtype=jnp.float32)

    out = model_forward(x, w0, w1, w2)
    jax.block_until_ready(out)
    assert out.shape == (B, C, L)
    assert jnp.allclose(out, _reference(x, w0, w1, w2), atol=1e-6), \
        "mismatch vs reference (default params)"

    # Extra check with random params so the scale/bias fold is actually tested
    # (with the default init the forward is the identity).
    rw0 = jax.random.normal(k0, (1, C, L), dtype=jnp.float32)
    rw1 = jax.random.normal(k1, (1, C, L), dtype=jnp.float32)
    rw2 = jax.random.normal(k2, (1, C, L), dtype=jnp.float32)
    out_r = model_forward(x, rw0, rw1, rw2)
    jax.block_until_ready(out_r)
    assert jnp.allclose(out_r, _reference(x, rw0, rw1, rw2), atol=1e-5), \
        "mismatch vs reference (random params)"

    # Also exercise a larger, ragged batch so the multi-step grid and the
    # masked last tile path are covered.
    xb = jax.random.normal(kx, (100, C, L), dtype=jnp.float32)
    out_b = model_forward(xb, rw0, rw1, rw2)
    jax.block_until_ready(out_b)
    assert jnp.allclose(out_b, _reference(xb, rw0, rw1, rw2), atol=1e-5), \
        "mismatch vs reference (large ragged batch)"

    print("KERNEL_OK")
</pallas_src>

<mosaic_0001>
module attributes {stable_mosaic.version = 11 : i64} {
  func.func @_affine_kernel(%arg0: i32, %arg1: memref<2x624xf32, #tpu.memory_space<vmem>>, %arg2: memref<2x624xf32, #tpu.memory_space<vmem>>, %arg3: memref<2x624xf32, #tpu.memory_space<vmem>>) attributes {dimension_semantics = [#tpu.dimension_semantics<parallel>], iteration_bounds = array<i64: 1>, scalar_prefetch = 0 : i64, scratch_operands = 0 : i64, tpu.core_type = #tpu.core_type<tc>, window_params = [{transform_indices = @transform_0, window_bounds = array<i64: 2, 624>}, {pipeline_mode = #tpu.pipeline_mode<synchronous>, transform_indices = @transform_1, window_bounds = array<i64: 2, 624>}, {transform_indices = @transform_2, window_bounds = array<i64: 2, 624>}]} {
    %c0 = arith.constant 0 : index
    %c0_0 = arith.constant 0 : index
    %0 = vector.load %arg2[%c0, %c0_0] : memref<2x624xf32, #tpu.memory_space<vmem>>, vector<2x624xf32>
    %1 = vector.extract_strided_slice %0 {offsets = [0, 0], sizes = [1, 624], strides = [1, 1]} : vector<2x624xf32> to vector<1x624xf32>
    %2 = vector.extract_strided_slice %0 {offsets = [1, 0], sizes = [1, 624], strides = [1, 1]} : vector<2x624xf32> to vector<1x624xf32>
    %c0_1 = arith.constant 0 : index
    %c0_2 = arith.constant 0 : index
    %3 = vector.load %arg1[%c0_1, %c0_2] : memref<2x624xf32, #tpu.memory_space<vmem>>, vector<2x624xf32>
    %4 = vector.broadcast %1 : vector<1x624xf32> to vector<2x624xf32>
    %5 = arith.mulf %3, %4 : vector<2x624xf32>
    %6 = vector.broadcast %2 : vector<1x624xf32> to vector<2x624xf32>
    %7 = arith.addf %5, %6 : vector<2x624xf32>
    %c0_3 = arith.constant 0 : index
    %c0_4 = arith.constant 0 : index
    %8 = vector.load %arg3[%c0_3, %c0_4] : memref<2x624xf32, #tpu.memory_space<vmem>>, vector<2x624xf32>
    tpu.vector_store %arg3[%c0_3, %c0_4], %7 {strides = array<i32>} : memref<2x624xf32, #tpu.memory_space<vmem>>, vector<2x624xf32>,
    return
  }
  func.func @transform_0(%arg0: i32) -> (i32, i32) {
    %c0_i32 = arith.constant 0 : i32
    %c0_i32_0 = arith.constant 0 : i32
    return %arg0, %c0_i32 : i32, i32
  }
  func.func @transform_1(%arg0: i32) -> (i32, i32) {
    %c0_i32 = arith.constant 0 : i32
    %c0_i32_0 = arith.constant 0 : i32
    %c0_i32_1 = arith.constant 0 : i32
    return %c0_i32, %c0_i32_0 : i32, i32
  }
  func.func @transform_2(%arg0: i32) -> (i32, i32) {
    %c0_i32 = arith.constant 0 : i32
    %c0_i32_0 = arith.constant 0 : i32
    return %arg0, %c0_i32 : i32, i32
  }
}

</mosaic_0001>

<llo_original>
// kernel: tpu_custom_call.1
$region0: #{tpu_custom_call.1}
  #allocation0 [shape = 'u32[]', space=smem, size = 0x4, offset = 0x4, fixed_abs, tag = 'smem constant byte address 0x4 - core index']
  #allocation1 [shape = 'u32[144,128]{1,0:T(1,128)}', space=vmem, size = 0x12000, scoped, tag = 'internal scratch']
  %s0 = inlined_call_operand.hbm [shape: f32[2,624], index: 0, kind: input, shape index: {}]
  %s1 = inlined_call_operand.hbm [shape: f32[2,624], index: 1, kind: input, shape index: {}]
  %s2 = inlined_call_operand.hbm [shape: f32[2,624], index: 2, kind: output, shape index: {}]
  %s3 = sld [smem:[#allocation0]]
  $region26: #{tpu_custom_call.1} parent=0
    _
  %s5 = ssub.s32 1, %s3
  %s6 = scalar_select 0, %s5, %s3
  $region1: #{tpu_custom_call.1} parent=0
    #allocation2 [shape = 'u8[5120]{0}', space=vmem, size = 0x1400, scoped, tag = 'input window, operand 0, single buffered']
    #allocation3 [shape = 's32[1]{0}', space=sflag, size = 0x4, scoped, tag = 'scoped memory for tpu_custom_call.1']
    #allocation4 [shape = 's32[1]{0}', space=sflag, size = 0x4, scoped, tag = 'scoped memory for tpu_custom_call.1']
    #allocation5 [shape = 'u8[5120]{0}', space=vmem, size = 0x1400, scoped, tag = 'input window, operand 1, single buffered']
    #allocation6 [shape = 's32[1]{0}', space=sflag, size = 0x4, scoped, tag = 'scoped memory for tpu_custom_call.1']
    #allocation7 [shape = 'u8[5120]{0}', space=vmem, size = 0x1400, scoped, tag = 'output window, operand 0, single buffered']
    %7 = vsyncpa [#allocation3], 0
    %8 = vsyncpa [#allocation6], 0
    %9 = vsyncpa [#allocation4], 0
    // Predicated region
    $region2: #{tpu_custom_call.1} parent=1 // pred_check
      _
    $region3: #{tpu_custom_call.1} parent=1 // pred_check_branch
      %11 = sbr.rel (0) target = $region5
    $region4: #{tpu_custom_call.1} parent=1 // pred_region
      %s13 = ssub.s32 160, 160
      %14 = vsyncadd [#allocation3], %s13
      %s16 = sshll.u32 [#allocation2], 4
      %s17 = int_to_ptr.vmem [resolvable:$true] %s16
      %19 = dma.hbm_to_vmem [thread:$0]  %s0, 160, %s17, [#allocation3]
    $region5: #{tpu_custom_call.1} parent=1 // pred_fallthru
      _
    // Predicated region
    $region6: #{tpu_custom_call.1} parent=1 // pred_check
      _
    $region7: #{tpu_custom_call.1} parent=1 // pred_check_branch
      %21 = sbr.rel (0) target = $region9
    $region8: #{tpu_custom_call.1} parent=1 // pred_region
      %s23 = ssub.s32 160, 160
      %24 = vsyncadd [#allocation6], %s23
      %s26 = sshll.u32 [#allocation5], 4
      %s27 = int_to_ptr.vmem [resolvable:$true] %s26
      %29 = dma.hbm_to_vmem [thread:$0]  %s1, 160, %s27, [#allocation6]
    $region9: #{tpu_custom_call.1} parent=1 // pred_fallthru
      _
    // Predicated region
    $region10: #{tpu_custom_call.1} parent=1 // pred_check
      _
    $region11: #{tpu_custom_call.1} parent=1 // pred_check_branch
      %31 = sbr.rel (0) target = $region13
    $region12: #{tpu_custom_call.1} parent=1 // pred_region
      %32 = dma.done [#allocation3], 160
    $region13: #{tpu_custom_call.1} parent=1 // pred_fallthru
      _
    // Predicated region
    $region14: #{tpu_custom_call.1} parent=1 // pred_check
      _
    $region15: #{tpu_custom_call.1} parent=1 // pred_check_branch
      %34 = sbr.rel (0) target = $region17
    $region16: #{tpu_custom_call.1} parent=1 // pred_region
      %35 = dma.done [#allocation6], 160
    $region17: #{tpu_custom_call.1} parent=1 // pred_fallthru
      _
    %v36 = vld [vmem:[#allocation5] sm:$0xff]
    %v37 = vld [vmem:[#allocation5 + $0x8] sm:$0x3]
    %v38 = vld [vmem:[#allocation2] sm:$0xff]
    %v39 = vld [vmem:[#allocation2 + $0x8] sm:$0x3]
    %v42 = vlaneseq
    %v43 = vshrl.u32 %v42, 7
    %v44 = vsub.s32 0, %v43
    %v45 = vrot.slane %v36, %v44
    %v46 = vlaneseq
    %v47 = vshrl.u32 %v46, 7
    %v48 = vsub.s32 2, %v47
    %v49 = vrot.slane %v36, %v48
    %v50 = vlaneseq
    %v51 = vshrl.u32 %v50, 7
    %v52 = vsub.s32 4, %v51
    %v53 = vrot.slane %v36, %v52
    %v54 = vlaneseq
    %v55 = vshrl.u32 %v54, 7
    %v56 = vsub.s32 6, %v55
    %v57 = vrot.slane %v36, %v56
    %v58 = vlaneseq
    %v59 = vshrl.u32 %v58, 7
    %v60 = vsub.s32 0, %v59
    %v61 = vrot.slane %v37, %v60
    %v67 = vlaneseq
    %v68 = vshrl.u32 %v67, 7
    %v69 = vsub.s32 0, %v68
    %v70 = vrot.slane %v45, %v69
    %v71 = vlaneseq
    %v72 = vshrl.u32 %v71, 7
    %v73 = vsub.s32 0, %v72
    %v74 = vrot.slane %v49, %v73
    %v75 = vlaneseq
    %v76 = vshrl.u32 %v75, 7
    %v77 = vsub.s32 0, %v76
    %v78 = vrot.slane %v53, %v77
    %v79 = vlaneseq
    %v80 = vshrl.u32 %v79, 7
    %v81 = vsub.s32 0, %v80
    %v82 = vrot.slane %v57, %v81
    %v83 = vlaneseq
    %v84 = vshrl.u32 %v83, 7
    %v85 = vsub.s32 0, %v84
    %v86 = vrot.slane %v61, %v85
    %v92 = vcombine.low %v70, %v74
    %v93 = vcombine.low %v78, %v82
    %v95 = vunpack.c.l.s4 1983009808
    %v96 = vunpack.c.0.s8 %v95
    %v97 = vlaneseq
    %v98 = vshrl.u32 %v97, 7
    %v99 = vsub.s32 %v96, %v98
    %v100 = vrot.slane %v92, %v99
    %v102 = vunpack.c.l.s4 1983009808
    %v103 = vunpack.c.0.s8 %v102
    %v104 = vlaneseq
    %v105 = vshrl.u32 %v104, 7
    %v106 = vsub.s32 %v103, %v105
    %v107 = vrot.slane %v93, %v106
    %v108 = vcombine.low %v100, %v107
    %v110 = vunpack.c.l.s4 1983009808
    %v111 = vunpack.c.0.s8 %v110
    %v112 = vlaneseq
    %v113 = vshrl.u32 %v112, 7
    %v114 = vsub.s32 %v111, %v113
    %v115 = vrot.slane %v86, %v114
    %v118 = vmul.f32 %v38, %v108
    %v119 = vmul.f32 %v39, %v115
    %v120 = vlaneseq
    %v121 = vshrl.u32 %v120, 7
    %v122 = vsub.s32 1, %v121
    %v123 = vrot.slane %v36, %v122
    %v124 = vlaneseq
    %v125 = vshrl.u32 %v124, 7
    %v126 = vsub.s32 3, %v125
    %v127 = vrot.slane %v36, %v126
    %v128 = vlaneseq
    %v129 = vshrl.u32 %v128, 7
    %v130 = vsub.s32 5, %v129
    %v131 = vrot.slane %v36, %v130
    %v132 = vlaneseq
    %v133 = vshrl.u32 %v132, 7
    %v134 = vsub.s32 7, %v133
    %v135 = vrot.slane %v36, %v134
    %v136 = vlaneseq
    %v137 = vshrl.u32 %v136, 7
    %v138 = vsub.s32 1, %v137
    %v139 = vrot.slane %v37, %v138
    %v145 = vlaneseq
    %v146 = vshrl.u32 %v145, 7
    %v147 = vsub.s32 1, %v146
    %v148 = vrot.slane %v123, %v147
    %v149 = vlaneseq
    %v150 = vshrl.u32 %v149, 7
    %v151 = vsub.s32 1, %v150
    %v152 = vrot.slane %v127, %v151
    %v153 = vlaneseq
    %v154 = vshrl.u32 %v153, 7
    %v155 = vsub.s32 1, %v154
    %v156 = vrot.slane %v131, %v155
    %v157 = vlaneseq
    %v158 = vshrl.u32 %v157, 7
    %v159 = vsub.s32 1, %v158
    %v160 = vrot.slane %v135, %v159
    %v161 = vlaneseq
    %v162 = vshrl.u32 %v161, 7
    %v163 = vsub.s32 1, %v162
    %v164 = vrot.slane %v139, %v163
    %v170 = vcombine.low %v148, %v152
    %v171 = vcombine.low %v156, %v160
    %v173 = vunpack.c.l.s4 1983009808
    %v174 = vunpack.c.0.s8 %v173
    %v175 = vlaneseq
    %v176 = vshrl.u32 %v175, 7
    %v177 = vsub.s32 %v174, %v176
    %v178 = vrot.slane %v170, %v177
    %v180 = vunpack.c.l.s4 1983009808
    %v181 = vunpack.c.0.s8 %v180
    %v182 = vlaneseq
    %v183 = vshrl.u32 %v182, 7
    %v184 = vsub.s32 %v181, %v183
    %v185 = vrot.slane %v171, %v184
    %v186 = vcombine.low %v178, %v185
    %v188 = vunpack.c.l.s4 1983009808
    %v189 = vunpack.c.0.s8 %v188
    %v190 = vlaneseq
    %v191 = vshrl.u32 %v190, 7
    %v192 = vsub.s32 %v189, %v191
    %v193 = vrot.slane %v164, %v192
    %v196 = vadd.f32 %v118, %v186
    %v197 = vadd.f32 %v119, %v193
    %198 = vst [vmem:[#allocation7] sm:$0xff] %v196
    %vm199 = vcmask 910336
    %200 = vst.msk [vmem:[#allocation7 + $0x8] sm:$0x3] %vm199, %v197
    // Predicated region
    $region18: #{tpu_custom_call.1} parent=1 // pred_check
      _
    $region19: #{tpu_custom_call.1} parent=1 // pred_check_branch
      %202 = sbr.rel (0) target = $region21
    $region20: #{tpu_custom_call.1} parent=1 // pred_region
      %s204 = ssub.s32 160, 160
      %205 = vsyncadd [#allocation4], %s204
      %s207 = sshll.u32 [#allocation7], 4
      %s208 = int_to_ptr.vmem [resolvable:$true] %s207
      %210 = dma.vmem_to_hbm [thread:$0]  %s208, 160, %s2, [#allocation4]
    $region21: #{tpu_custom_call.1} parent=1 // pred_fallthru
      _
    // Predicated region
    $region22: #{tpu_custom_call.1} parent=1 // pred_check
      _
    $region23: #{tpu_custom_call.1} parent=1 // pred_check_branch
      %212 = sbr.rel (0) target = $region25
    $region24: #{tpu_custom_call.1} parent=1 // pred_region
      %213 = dma.done [#allocation4], 160
    $region25: #{tpu_custom_call.1} parent=1 // pred_fallthru
      _
    %214 = vsyncpa [#allocation3], 1
    %215 = vsyncpa [#allocation6], 1
    %216 = vsyncpa [#allocation4], 1

</llo_original>
